<compile_context>
chip_gen: v7x
topology: tpu7x:2x2x1
jax: 0.10.0
libtpu: 0.0.40
codegen_flags: <defaults>
</compile_context>

<pallas_src>
import functools
import math

import jax
import jax.numpy as jnp
from jax import lax
from jax.experimental import pallas as pl
from jax.experimental.pallas import tpu as pltpu


def _round_up(x: int, m: int) -> int:
    return (x + m - 1) // m * m


# ----------------------------- activation maps ------------------------------
def _kernel_activation(name: str):
    """Activation used inside the Pallas kernel."""
    name = name.lower()
    if name == "relu":
        return lambda h: jnp.maximum(h, 0.0)
    if name == "l_relu":
        return lambda h: jnp.where(h >= 0.0, h, 0.01 * h)
    if name == "sigmoid":
        return jax.nn.sigmoid          # exp + recip both land on the EUP slot
    if name == "tanh":
        return jnp.tanh
    if name == "none":
        return lambda h: h
    raise ValueError(f"unknown activation: {name}")


def _ref_activation(name: str):
    """Activation used in the plain-JAX reference."""
    name = name.lower()
    if name == "relu":
        return lambda h: jnp.maximum(h, 0.0)
    if name == "l_relu":
        return lambda h: jnp.where(h >= 0.0, h, 0.01 * h)
    if name == "sigmoid":
        return jax.nn.sigmoid
    if name == "tanh":
        return jnp.tanh
    if name == "none":
        return lambda h: h
    raise ValueError(f"unknown activation: {name}")


# ------------------------------- the kernel --------------------------------
def _make_mlp_kernel(hidden_pad, activation: str):
    """Fused MLP forward.

    refs = (x, W_0..W_{H-1}, W_head_T, b_packed, b_head_col, out)
      x         : (tb, in_dim)
      W_i       : (K_i_pad, width_i_pad)          resident in VMEM
      W_head_T  : (out_sub_pad, K_last_pad)       resident
      b_packed  : (H, max_width_pad)              resident, row i = bias of layer i
      b_head_col: (out_sub_pad, 1)                resident
      out       : (out_sub_pad, tb)   -- batch on the lane axis (lane-dense store)
    """
    act = _kernel_activation(activation)
    nh = len(hidden_pad)

    def kernel(*refs):
        x_ref = refs[0]
        w_refs = refs[1:1 + nh]
        w_head_ref = refs[1 + nh]
        b_ref = refs[2 + nh]
        b_head_ref = refs[3 + nh]
        out_ref = refs[4 + nh]

        h = x_ref[...].astype(jnp.float32)
        for li, wp in enumerate(hidden_pad):
            h = act(
                jnp.dot(h, w_refs[li][...], preferred_element_type=jnp.float32)
                + b_ref[li:li + 1, :wp]            # static, lane-aligned slice
            )

        # Transposed head: (out_sub, K) . (tb, K) contracting K with K -> (out_sub, tb)
        y_t = lax.dot_general(
            w_head_ref[...], h,
            dimension_numbers=(((1,), (1,)), ((), ())),
            preferred_element_type=jnp.float32,
        ) + b_head_ref[...]
        out_ref[...] = y_t.astype(out_ref.dtype)

    return kernel


# ------------------------------ parameter init -----------------------------
def init_mlp_params(key, input_dim, output_dim, hidden_layer_list, use_bn=True):
    """PyTorch-style Linear init + non-trivial BatchNorm1d running stats."""
    dims = [input_dim, *hidden_layer_list]
    layers = []
    for i in range(len(dims) - 1):
        fan_in, fan_out = dims[i], dims[i + 1]
        key, kw, kb = jax.random.split(key, 3)
        bound = 1.0 / math.sqrt(fan_in)
        layer = {
            "W": jax.random.uniform(kw, (fan_in, fan_out), jnp.float32, -bound, bound),
            "b": jax.random.uniform(kb, (fan_out,), jnp.float32, -bound, bound),
        }
        if use_bn:
            key, k1, k2, k3, k4 = jax.random.split(key, 5)
            layer["gamma"] = jax.random.uniform(k1, (fan_out,), jnp.float32, 0.5, 1.5)
            layer["beta"] = 0.1 * jax.random.normal(k2, (fan_out,), jnp.float32)
            layer["mean"] = 0.1 * jax.random.normal(k3, (fan_out,), jnp.float32)
            layer["var"] = jax.random.uniform(k4, (fan_out,), jnp.float32, 0.5, 1.5)
        layers.append(layer)

    fan_in = dims[-1]
    key, kw, kb = jax.random.split(key, 3)
    bound = 1.0 / math.sqrt(fan_in)
    head = {
        "W": jax.random.uniform(kw, (fan_in, output_dim), jnp.float32, -bound, bound),
        "b": jax.random.uniform(kb, (output_dim,), jnp.float32, -bound, bound),
    }
    return {"layers": layers, "head": head}


# --------------------- trace-time parameter preparation ---------------------
def _fold_params(params, output_dim, use_bn, eps=1e-5):
    """Fold post-activation BN into the next Linear, pad hidden widths (and the
    head's K dim) to 128 lanes, pad the head's output dim to 8 sublanes, pack
    hidden biases into one array, and pre-transpose the head weight."""
    layers = params["layers"]
    head = params["head"]
    Ws = [l["W"] for l in layers] + [head["W"]]
    bs = [l["b"] for l in layers] + [head["b"]]

    if use_bn:
        for i, l in enumerate(layers):
            s = l["gamma"] / jnp.sqrt(l["var"] + eps)     # per-feature scale
            t = l["beta"] - l["mean"] * s                 # per-feature shift
            w_next = Ws[i + 1]
            bs[i + 1] = bs[i + 1] + t @ w_next            # uses *unscaled* W_next
            Ws[i + 1] = w_next * s[:, None]

    num_hidden = len(layers)
    hidden_pad = [_round_up(w.shape[1], 128) for w in Ws[:num_hidden]]
    # Padded K (row) dim of each layer: input stays unpadded, rest are padded widths.
    k_dims = [Ws[0].shape[0]] + hidden_pad

    Ws_p = []
    for i in range(num_hidden):
        w = Ws[i]
        wp = jnp.zeros((k_dims[i], hidden_pad[i]), jnp.float32)
        Ws_p.append(wp.at[:w.shape[0], :w.shape[1]].set(w))

    # Head: pad K dim, pad output dim to 8 sublanes, store transposed.
    out_sub = _round_up(max(output_dim, 1), 8)
    k_head = k_dims[num_hidden]
    w_head = Ws[-1]
    w_head_p = jnp.zeros((k_head, out_sub), jnp.float32)
    w_head_p = w_head_p.at[:w_head.shape[0], :w_head.shape[1]].set(w_head)
    w_head_t = w_head_p.T                                  # (out_sub, k_head)
    b_head_col = jnp.zeros((out_sub, 1), jnp.float32).at[:output_dim, 0].set(bs[-1])

    # Pack hidden biases: row i = bias of hidden layer i, zero padded to 128*k lanes.
    if num_hidden > 0:
        max_w = max(hidden_pad)
        b_packed = jnp.zeros((num_hidden, max_w), jnp.float32)
        for i in range(num_hidden):
            b_packed = b_packed.at[i, :bs[i].shape[0]].set(bs[i])
    else:
        b_packed = jnp.zeros((1, 128), jnp.float32)        # unused dummy

    return Ws_p, w_head_t, b_packed, b_head_col, tuple(hidden_pad), out_sub


# --------------------------------- wrapper ---------------------------------
@functools.partial(jax.jit,
                   static_argnames=("output_dim", "activation", "use_bn", "tile_b"))
def mlp_forward(x, params, *, output_dim, activation, use_bn, tile_b=1024):
    B, in_dim = x.shape
    (Ws, w_head_t, b_packed, b_head_col,
     hidden_pad, out_sub) = _fold_params(params, output_dim, use_bn)

    # Batch tile: multiple of 128 (lane-dense transposed output store), capped
    # at tile_b, and chosen so the grid has >= 2 steps whenever B permits
    # (keeps v7x's second TensorCore busy via the "parallel" batch axis).
    tile_b = _round_up(max(tile_b, 128), 128)
    tb = max(128, min(tile_b, _round_up(-(-B // 2), 128)))
    b_pad = _round_up(B, tb)
    if b_pad != B:
        x = jnp.pad(x, ((0, b_pad - B), (0, 0)))
    grid = (b_pad // tb,)

    kernel = _make_mlp_kernel(hidden_pad, activation)

    in_specs = [pl.BlockSpec((tb, in_dim), lambda i: (i, 0))]          # streamed
    for w in Ws:                                                       # resident
        in_specs.append(pl.BlockSpec(w.shape, lambda i: (0, 0)))
    in_specs.append(pl.BlockSpec(w_head_t.shape, lambda i: (0, 0)))    # resident
    in_specs.append(pl.BlockSpec(b_packed.shape, lambda i: (0, 0)))    # resident
    in_specs.append(pl.BlockSpec(b_head_col.shape, lambda i: (0, 0)))  # resident

    out = pl.pallas_call(
        kernel,
        out_shape=jax.ShapeDtypeStruct((out_sub, b_pad), jnp.float32),
        grid=grid,
        in_specs=in_specs,
        out_specs=pl.BlockSpec((out_sub, tb), lambda i: (0, i)),
        compiler_params=pltpu.CompilerParams(
            dimension_semantics=("parallel",),          # shard batch across TCs (v7x)
            vmem_limit_bytes=32 * 1024 * 1024,          # safe on v7x's 64 MiB VMEM
        ),
    )(x, *Ws, w_head_t, b_packed, b_head_col)

    # Transposed, padded output -> (B, output_dim).  Padded batch rows (which
    # carry activation-of-zero garbage) and padded output rows are sliced off.
    return out[:output_dim, :B].T


# Plain-JAX reference (un-folded math, same op order as the PyTorch module:
# Linear -> activation -> BatchNorm1d(eval) per hidden layer, then the head).
def mlp_reference(x, params, *, activation, use_bn, eps=1e-5):
    act = _ref_activation(activation)
    h = x.astype(jnp.float32)
    for l in params["layers"]:
        h = act(h @ l["W"] + l["b"])
        if use_bn:
            s = l["gamma"] / jnp.sqrt(l["var"] + eps)
            t = l["beta"] - l["mean"] * s
            h = h * s + t
    head = params["head"]
    return h @ head["W"] + head["b"]


# ----------------------------------- main -----------------------------------
if __name__ == "__main__":
    # Module config: MLP(input_dim=16, output_dim=2, activation='relu',
    #                    hidden_layer_list=[32, 32], batch_normalization=True,
    #                    dropout_rate=0)
    # TODO(synk): training-mode Dropout and batch-statistic BatchNorm are not
    #             implemented; this is the eval/inference forward pass.
    input_dim, output_dim = 16, 2
    hidden_layer_list = [32, 32]
    activation = "relu"
    use_bn = True
    batch = 8

    key = jax.random.PRNGKey(0)
    key_x, key_p = jax.random.split(key)
    x = jax.random.normal(key_x, (batch, input_dim), jnp.float32)
    params = init_mlp_params(key_p, input_dim, output_dim, hidden_layer_list, use_bn)

    out = mlp_forward(
        x, params,
        output_dim=output_dim, activation=activation, use_bn=use_bn,
    )
    out = jax.block_until_ready(out)

    ref = mlp_reference(x, params, activation=activation, use_bn=use_bn)

    assert out.shape == (batch, output_dim), out.shape
    assert jnp.allclose(out, ref, atol=1e-4, rtol=1e-4), float(
        jnp.max(jnp.abs(out - ref)))

    print("KERNEL_OK")
</pallas_src>

<mosaic_0001>
module attributes {stable_mosaic.version = 11 : i64} {
  func.func @kernel(%arg0: i32, %arg1: memref<128x16xf32, #tpu.memory_space<vmem>>, %arg2: memref<16x128xf32, #tpu.memory_space<vmem>>, %arg3: memref<128x128xf32, #tpu.memory_space<vmem>>, %arg4: memref<8x128xf32, #tpu.memory_space<vmem>>, %arg5: memref<2x128xf32, #tpu.memory_space<vmem>>, %arg6: memref<8x1xf32, #tpu.memory_space<vmem>>, %arg7: memref<8x128xf32, #tpu.memory_space<vmem>>) attributes {dimension_semantics = [#tpu.dimension_semantics<parallel>], iteration_bounds = array<i64: 1>, scalar_prefetch = 0 : i64, scratch_operands = 0 : i64, tpu.core_type = #tpu.core_type<tc>, window_params = [{transform_indices = @transform_0, window_bounds = array<i64: 128, 16>}, {pipeline_mode = #tpu.pipeline_mode<synchronous>, transform_indices = @transform_1, window_bounds = array<i64: 16, 128>}, {pipeline_mode = #tpu.pipeline_mode<synchronous>, transform_indices = @transform_2, window_bounds = array<i64: 128, 128>}, {pipeline_mode = #tpu.pipeline_mode<synchronous>, transform_indices = @transform_3, window_bounds = array<i64: 8, 128>}, {pipeline_mode = #tpu.pipeline_mode<synchronous>, transform_indices = @transform_4, window_bounds = array<i64: 2, 128>}, {pipeline_mode = #tpu.pipeline_mode<synchronous>, transform_indices = @transform_5, window_bounds = array<i64: 8, 1>}, {transform_indices = @transform_6, window_bounds = array<i64: 8, 128>}]} {
    %c0 = arith.constant 0 : index
    %c0_0 = arith.constant 0 : index
    %0 = vector.load %arg1[%c0, %c0_0] : memref<128x16xf32, #tpu.memory_space<vmem>>, vector<128x16xf32>
    %c0_1 = arith.constant 0 : index
    %c0_2 = arith.constant 0 : index
    %1 = vector.load %arg2[%c0_1, %c0_2] : memref<16x128xf32, #tpu.memory_space<vmem>>, vector<16x128xf32>
    %cst = arith.constant dense<0.000000e+00> : vector<128x128xf32>
    %2 = tpu.matmul %0, %1, %cst {dimension_numbers = #tpu.dot_dimension_numbers<[1], [0], [0], [1], [0, 0, 1, 1], [], []>} : vector<128x16xf32>, vector<16x128xf32>, vector<128x128xf32> -> vector<128x128xf32>
    %c0_3 = arith.constant 0 : index
    %c0_4 = arith.constant 0 : index
    %3 = vector.load %arg5[%c0_3, %c0_4] : memref<2x128xf32, #tpu.memory_space<vmem>>, vector<1x128xf32>
    %4 = vector.broadcast %3 : vector<1x128xf32> to vector<128x128xf32>
    %5 = arith.addf %2, %4 : vector<128x128xf32>
    %cst_5 = arith.constant 0.000000e+00 : f32
    %6 = vector.broadcast %cst_5 : f32 to vector<128x128xf32>
    %7 = arith.maximumf %5, %6 : vector<128x128xf32>
    %c0_6 = arith.constant 0 : index
    %c0_7 = arith.constant 0 : index
    %8 = vector.load %arg3[%c0_6, %c0_7] : memref<128x128xf32, #tpu.memory_space<vmem>>, vector<128x128xf32>
    %cst_8 = arith.constant dense<0.000000e+00> : vector<128x128xf32>
    %9 = tpu.matmul %7, %8, %cst_8 {dimension_numbers = #tpu.dot_dimension_numbers<[1], [0], [0], [1], [0, 0, 1, 1], [], []>} : vector<128x128xf32>, vector<128x128xf32>, vector<128x128xf32> -> vector<128x128xf32>
    %c1 = arith.constant 1 : index
    %c0_9 = arith.constant 0 : index
    %10 = vector.load %arg5[%c1, %c0_9] : memref<2x128xf32, #tpu.memory_space<vmem>>, vector<1x128xf32>
    %11 = vector.broadcast %10 : vector<1x128xf32> to vector<128x128xf32>
    %12 = arith.addf %9, %11 : vector<128x128xf32>
    %cst_10 = arith.constant 0.000000e+00 : f32
    %13 = vector.broadcast %cst_10 : f32 to vector<128x128xf32>
    %14 = arith.maximumf %12, %13 : vector<128x128xf32>
    %c0_11 = arith.constant 0 : index
    %c0_12 = arith.constant 0 : index
    %15 = vector.load %arg4[%c0_11, %c0_12] : memref<8x128xf32, #tpu.memory_space<vmem>>, vector<8x128xf32>
    %cst_13 = arith.constant dense<0.000000e+00> : vector<8x128xf32>
    %16 = tpu.matmul %15, %14, %cst_13 {dimension_numbers = #tpu.dot_dimension_numbers<[1], [1], [0], [0], [0, 0, 1, 0], [], []>} : vector<8x128xf32>, vector<128x128xf32>, vector<8x128xf32> -> vector<8x128xf32>
    %c0_14 = arith.constant 0 : index
    %c0_15 = arith.constant 0 : index
    %17 = vector.load %arg6[%c0_14, %c0_15] : memref<8x1xf32, #tpu.memory_space<vmem>>, vector<8x1xf32>
    %18 = vector.broadcast %17 : vector<8x1xf32> to vector<8x128xf32>
    %19 = arith.addf %16, %18 : vector<8x128xf32>
    %c0_16 = arith.constant 0 : index
    %c0_17 = arith.constant 0 : index
    %20 = vector.load %arg7[%c0_16, %c0_17] : memref<8x128xf32, #tpu.memory_space<vmem>>, vector<8x128xf32>
    tpu.vector_store %arg7[%c0_16, %c0_17], %19 {strides = array<i32>} : memref<8x128xf32, #tpu.memory_space<vmem>>, vector<8x128xf32>,
    return
  }
  func.func @transform_0(%arg0: i32) -> (i32, i32) {
    %c0_i32 = arith.constant 0 : i32
    %c0_i32_0 = arith.constant 0 : i32
    return %arg0, %c0_i32 : i32, i32
  }
  func.func @transform_1(%arg0: i32) -> (i32, i32) {
    %c0_i32 = arith.constant 0 : i32
    %c0_i32_0 = arith.constant 0 : i32
    %c0_i32_1 = arith.constant 0 : i32
    return %c0_i32, %c0_i32_0 : i32, i32
  }
  func.func @transform_2(%arg0: i32) -> (i32, i32) {
    %c0_i32 = arith.constant 0 : i32
    %c0_i32_0 = arith.constant 0 : i32
    %c0_i32_1 = arith.constant 0 : i32
    return %c0_i32, %c0_i32_0 : i32, i32
  }
  func.func @transform_3(%arg0: i32) -> (i32, i32) {
    %c0_i32 = arith.constant 0 : i32
    %c0_i32_0 = arith.constant 0 : i32
    %c0_i32_1 = arith.constant 0 : i32
    return %c0_i32, %c0_i32_0 : i32, i32
  }
  func.func @transform_4(%arg0: i32) -> (i32, i32) {
    %c0_i32 = arith.constant 0 : i32
    %c0_i32_0 = arith.constant 0 : i32
    %c0_i32_1 = arith.constant 0 : i32
    return %c0_i32, %c0_i32_0 : i32, i32
  }
  func.func @transform_5(%arg0: i32) -> (i32, i32) {
    %c0_i32 = arith.constant 0 : i32
    %c0_i32_0 = arith.constant 0 : i32
    %c0_i32_1 = arith.constant 0 : i32
    return %c0_i32, %c0_i32_0 : i32, i32
  }
  func.func @transform_6(%arg0: i32) -> (i32, i32) {
    %c0_i32 = arith.constant 0 : i32
    %c0_i32_0 = arith.constant 0 : i32
    return %c0_i32, %arg0 : i32, i32
  }
}

</mosaic_0001>

<llo_original>
// kernel: mlp_forward.1
$region0: #{mlp_forward.1}
  #allocation0 [shape = 'u32[]', space=smem, size = 0x4, offset = 0x4, fixed_abs, tag = 'smem constant byte address 0x4 - core index']
  #allocation1 [shape = 'u32[144,128]{1,0:T(1,128)}', space=vmem, size = 0x12000, scoped, tag = 'internal scratch']
  %s0 = inlined_call_operand.vmem [shape: f32[128,16], index: 0, kind: input, shape index: {}]
  %s1 = inlined_call_operand.vmem [shape: f32[16,128], index: 1, kind: input, shape index: {}]
  %s2 = inlined_call_operand.vmem [shape: f32[128,128], index: 2, kind: input, shape index: {}]
  %s3 = inlined_call_operand.vmem [shape: f32[8,128], index: 3, kind: input, shape index: {}]
  %s4 = inlined_call_operand.vmem [shape: f32[2,128], index: 4, kind: input, shape index: {}]
  %s5 = inlined_call_operand.vmem [shape: f32[8,1], index: 5, kind: input, shape index: {}]
  %s6 = inlined_call_operand.vmem [shape: f32[8,128], index: 6, kind: output, shape index: {}]
  %s7 = sld [smem:[#allocation0]]
  $region34: #{mlp_forward.1} parent=0
    _
  %s9 = ssub.s32 1, %s7
  %s10 = scalar_select 0, %s9, %s7
  // Predicated region
  $region2: #{mlp_forward.1} parent=0 // pred_check
    _
  $region3: #{mlp_forward.1} parent=0 // pred_check_branch
    %12 = sbr.rel (0) target = $region5
  $region4: #{mlp_forward.1} parent=0 // pred_region
    _
  $region5: #{mlp_forward.1} parent=0 // pred_fallthru
    _
  // Predicated region
  $region6: #{mlp_forward.1} parent=0 // pred_check
    _
  $region7: #{mlp_forward.1} parent=0 // pred_check_branch
    %14 = sbr.rel (0) target = $region9
  $region8: #{mlp_forward.1} parent=0 // pred_region
    _
  $region9: #{mlp_forward.1} parent=0 // pred_fallthru
    _
  // Predicated region
  $region10: #{mlp_forward.1} parent=0 // pred_check
    _
  $region11: #{mlp_forward.1} parent=0 // pred_check_branch
    %16 = sbr.rel (0) target = $region13
  $region12: #{mlp_forward.1} parent=0 // pred_region
    _
  $region13: #{mlp_forward.1} parent=0 // pred_fallthru
    _
  // Predicated region
  $region14: #{mlp_forward.1} parent=0 // pred_check
    _
  $region15: #{mlp_forward.1} parent=0 // pred_check_branch
    %18 = sbr.rel (0) target = $region17
  $region16: #{mlp_forward.1} parent=0 // pred_region
    _
  $region17: #{mlp_forward.1} parent=0 // pred_fallthru
    _
  // Predicated region
  $region18: #{mlp_forward.1} parent=0 // pred_check
    _
  $region19: #{mlp_forward.1} parent=0 // pred_check_branch
    %20 = sbr.rel (0) target = $region21
  $region20: #{mlp_forward.1} parent=0 // pred_region
    _
  $region21: #{mlp_forward.1} parent=0 // pred_fallthru
    _
  // Predicated region
  $region22: #{mlp_forward.1} parent=0 // pred_check
    _
  $region23: #{mlp_forward.1} parent=0 // pred_check_branch
    %22 = sbr.rel (0) target = $region25
  $region24: #{mlp_forward.1} parent=0 // pred_region
    _
  $region25: #{mlp_forward.1} parent=0 // pred_fallthru
    _
  %v23 = vld [vmem:[%s0] sm:$0xff]
  %v24 = vld [vmem:[%s0 + $0x8] sm:$0xff]
  %v25 = vld [vmem:[%s0 + $0x10] sm:$0xff]
  %v26 = vld [vmem:[%s0 + $0x18] sm:$0xff]
  %v27 = vld [vmem:[%s0 + $0x20] sm:$0xff]
  %v28 = vld [vmem:[%s0 + $0x28] sm:$0xff]
  %v29 = vld [vmem:[%s0 + $0x30] sm:$0xff]
  %v30 = vld [vmem:[%s0 + $0x38] sm:$0xff]
  %v31 = vld [vmem:[%s0 + $0x40] sm:$0xff]
  %v32 = vld [vmem:[%s0 + $0x48] sm:$0xff]
  %v33 = vld [vmem:[%s0 + $0x50] sm:$0xff]
  %v34 = vld [vmem:[%s0 + $0x58] sm:$0xff]
  %v35 = vld [vmem:[%s0 + $0x60] sm:$0xff]
  %v36 = vld [vmem:[%s0 + $0x68] sm:$0xff]
  %v37 = vld [vmem:[%s0 + $0x70] sm:$0xff]
  %v38 = vld [vmem:[%s0 + $0x78] sm:$0xff]
  %v39 = vld [vmem:[%s1] sm:$0xff]
  %v40 = vld [vmem:[%s1 + $0x8] sm:$0xff]
  %v41 = vld [vmem:[%s4] sm:$0x1]
  %v42 = vlaneseq
  %v43 = vshrl.u32 %v42, 7
  %v44 = vsub.s32 0, %v43
  %v45 = vrot.slane %v41, %v44
  %vm46 = vcmask 130048
  %v48 = vsel %vm46, %v23, 0
  %v51 = vsel %vm46, %v24, 0
  %v54 = vsel %vm46, %v25, 0
  %v57 = vsel %vm46, %v26, 0
  %v60 = vsel %vm46, %v27, 0
  %v63 = vsel %vm46, %v28, 0
  %v66 = vsel %vm46, %v29, 0
  %v69 = vsel %vm46, %v30, 0
  %v72 = vsel %vm46, %v31, 0
  %v75 = vsel %vm46, %v32, 0
  %v78 = vsel %vm46, %v33, 0
  %v81 = vsel %vm46, %v34, 0
  %v84 = vsel %vm46, %v35, 0
  %v87 = vsel %vm46, %v36, 0
  %v90 = vsel %vm46, %v37, 0
  %v93 = vsel %vm46, %v38, 0
  %95 = vmatprep.subr.mxu0 0.0
  %96 = vmatpush1.msra.mxu0 %v39
  %97 = vmatprep.subr.mxu0 0.0
  %98 = vmatpush1.msra.mxu0 %v40
  %99 = vmatprep.subr.mxu0 0.0
  %100 = vmatpush1.msra.mxu0 0.0
  %101 = vmatprep.subr.mxu0 0.0
  %102 = vmatpush1.msra.mxu0 0.0
  %103 = vmatprep.subr.mxu0 0.0
  %104 = vmatpush1.msra.mxu0 0.0
  %105 = vmatprep.subr.mxu0 0.0
  %106 = vmatpush1.msra.mxu0 0.0
  %107 = vmatprep.subr.mxu0 0.0
  %108 = vmatpush1.msra.mxu0 0.0
  %109 = vmatprep.subr.mxu0 0.0
  %110 = vmatpush1.msra.mxu0 0.0
  %111 = vmatprep.subr.mxu0 0.0
  %112 = vmatpush1.msra.mxu0 0.0
  %113 = vmatprep.subr.mxu0 0.0
  %114 = vmatpush1.msra.mxu0 0.0
  %115 = vmatprep.subr.mxu0 0.0
  %116 = vmatpush1.msra.mxu0 0.0
  %117 = vmatprep.subr.mxu0 0.0
  %118 = vmatpush1.msra.mxu0 0.0
  %119 = vmatprep.subr.mxu0 0.0
  %120 = vmatpush1.msra.mxu0 0.0
  %121 = vmatprep.subr.mxu0 0.0
  %122 = vmatpush1.msra.mxu0 0.0
  %123 = vmatprep.subr.mxu0 0.0
  %124 = vmatpush1.msra.mxu0 0.0
  %125 = vmatprep.subr.mxu0 0.0
  %126 = vmatpush1.msra.mxu0 0.0
  %127 = vmatprep.subr.mxu0 0.0
  %128 = vmatpush1.msra.mxu0 0.0
  %129 = vmatprep.subr.mxu0 0.0
  %130 = vmatpush1.msra.mxu0 0.0
  %131 = vmatprep.subr.mxu0 0.0
  %132 = vmatpush1.msra.mxu0 0.0
  %133 = vmatprep.subr.mxu0 0.0
  %134 = vmatpush1.msra.mxu0 0.0
  %135 = vmatprep.subr.mxu0 0.0
  %136 = vmatpush1.msra.mxu0 0.0
  %137 = vmatprep.subr.mxu0 0.0
  %138 = vmatpush1.msra.mxu0 0.0
  %139 = vmatprep.subr.mxu0 0.0
  %140 = vmatpush1.msra.mxu0 0.0
  %141 = vmatprep.subr.mxu0 0.0
  %142 = vmatpush1.msra.mxu0 0.0
  %143 = vmatprep.subr.mxu0 0.0
  %144 = vmatpush1.msra.mxu0 0.0
  %145 = vmatprep.subr.mxu0 0.0
  %146 = vmatpush1.msra.mxu0 0.0
  %147 = vmatprep.subr.mxu0 0.0
  %148 = vmatpush1.msra.mxu0 0.0
  %149 = vmatprep.subr.mxu0 0.0
  %150 = vmatpush1.msra.mxu0 0.0
  %151 = vmatprep.subr.mxu0 0.0
  %152 = vmatpush1.msra.mxu0 0.0
  %153 = vmatprep.subr.mxu0 0.0
  %154 = vmatpush1.msra.mxu0 0.0
  %155 = vmatprep.subr.mxu0 0.0
  %156 = vmatpush1.msra.mxu0 0.0
  %157 = vmatprep.subr.mxu0 0.0
  %158 = vmatpush1.msra.mxu0 0.0
  %159 = vmatprep.mubr.f32.mxu0 0.0
  %160 = vmatmul.mubr.f32.gmra.mrb[0].mxu0 %v48
  %v161 = vpop.f32.mrb[0].mxu0
  %v162 = vadd.f32 %v45, %v161
  %v163 = vpop.f32.mrb[0].mxu0
  %164 = vmatprep.mubr.f32.mxu0 0.0
  %165 = vmatmul.mubr.f32.gmra.mrb[0].mxu0 %v51
  %v166 = vpop.f32.mrb[0].mxu0
  %v167 = vadd.f32 %v45, %v166
  %v168 = vpop.f32.mrb[0].mxu0
  %169 = vmatprep.mubr.f32.mxu0 0.0
  %170 = vmatmul.mubr.f32.gmra.mrb[0].mxu0 %v54
  %v171 = vpop.f32.mrb[0].mxu0
  %v172 = vadd.f32 %v45, %v171
  %v173 = vpop.f32.mrb[0].mxu0
  %174 = vmatprep.mubr.f32.mxu0 0.0
  %175 = vmatmul.mubr.f32.gmra.mrb[0].mxu0 %v57
  %v176 = vpop.f32.mrb[0].mxu0
  %v177 = vadd.f32 %v45, %v176
  %v178 = vpop.f32.mrb[0].mxu0
  %179 = vmatprep.mubr.f32.mxu0 0.0
  %180 = vmatmul.mubr.f32.gmra.mrb[0].mxu0 %v60
  %v181 = vpop.f32.mrb[0].mxu0
  %v182 = vadd.f32 %v45, %v181
  %v183 = vpop.f32.mrb[0].mxu0
  %184 = vmatprep.mubr.f32.mxu0 0.0
  %185 = vmatmul.mubr.f32.gmra.mrb[0].mxu0 %v63
  %v186 = vpop.f32.mrb[0].mxu0
  %v187 = vadd.f32 %v45, %v186
  %v188 = vpop.f32.mrb[0].mxu0
  %189 = vmatprep.mubr.f32.mxu0 0.0
  %190 = vmatmul.mubr.f32.gmra.mrb[0].mxu0 %v66
  %v191 = vpop.f32.mrb[0].mxu0
  %v192 = vadd.f32 %v45, %v191
  %v193 = vpop.f32.mrb[0].mxu0
  %194 = vmatprep.mubr.f32.mxu0 0.0
  %195 = vmatmul.mubr.f32.gmra.mrb[0].mxu0 %v69
  %v196 = vpop.f32.mrb[0].mxu0
  %v197 = vadd.f32 %v45, %v196
  %v198 = vpop.f32.mrb[0].mxu0
  %199 = vmatprep.mubr.f32.mxu0 0.0
  %200 = vmatmul.mubr.f32.gmra.mrb[0].mxu0 %v72
  %v201 = vpop.f32.mrb[0].mxu0
  %v202 = vadd.f32 %v45, %v201
  %v203 = vpop.f32.mrb[0].mxu0
  %204 = vmatprep.mubr.f32.mxu0 0.0
  %205 = vmatmul.mubr.f32.gmra.mrb[0].mxu0 %v75
  %v206 = vpop.f32.mrb[0].mxu0
  %v207 = vadd.f32 %v45, %v206
  %v208 = vpop.f32.mrb[0].mxu0
  %209 = vmatprep.mubr.f32.mxu0 0.0
  %210 = vmatmul.mubr.f32.gmra.mrb[0].mxu0 %v78
  %v211 = vpop.f32.mrb[0].mxu0
  %v212 = vadd.f32 %v45, %v211
  %v213 = vpop.f32.mrb[0].mxu0
  %214 = vmatprep.mubr.f32.mxu0 0.0
  %215 = vmatmul.mubr.f32.gmra.mrb[0].mxu0 %v81
  %v216 = vpop.f32.mrb[0].mxu0
  %v217 = vadd.f32 %v45, %v216
  %v218 = vpop.f32.mrb[0].mxu0
  %219 = vmatprep.mubr.f32.mxu0 0.0
  %220 = vmatmul.mubr.f32.gmra.mrb[0].mxu0 %v84
  %v221 = vpop.f32.mrb[0].mxu0
  %v222 = vadd.f32 %v45, %v221
  %v223 = vpop.f32.mrb[0].mxu0
  %224 = vmatprep.mubr.f32.mxu0 0.0
  %225 = vmatmul.mubr.f32.gmra.mrb[0].mxu0 %v87
  %v226 = vpop.f32.mrb[0].mxu0
  %v227 = vadd.f32 %v45, %v226
  %v228 = vpop.f32.mrb[0].mxu0
  %229 = vmatprep.mubr.f32.mxu0 0.0
  %230 = vmatmul.mubr.f32.gmra.mrb[0].mxu0 %v90
  %v231 = vpop.f32.mrb[0].mxu0
  %v232 = vadd.f32 %v45, %v231
  %v233 = vpop.f32.mrb[0].mxu0
  %234 = vmatprep.mubr.f32.mxu0 0.0
  %235 = vmatmul.mubr.f32.gmra.mrb[0].mxu0 %v93
  %v236 = vpop.f32.mrb[0].mxu0
  %v237 = vadd.f32 %v45, %v236
  %v238 = vpop.f32.mrb[0].mxu0
  %239 = vdwg.mxu0
  %v240 = vmax.f32 %v162, 0.0
  %v241 = vmax.f32 %v167, 0.0
  %v242 = vmax.f32 %v172, 0.0
  %v243 = vmax.f32 %v177, 0.0
  %v244 = vmax.f32 %v182, 0.0
  %v245 = vmax.f32 %v187, 0.0
  %v246 = vmax.f32 %v192, 0.0
  %v247 = vmax.f32 %v197, 0.0
  %v248 = vmax.f32 %v202, 0.0
  %v249 = vmax.f32 %v207, 0.0
  %v250 = vmax.f32 %v212, 0.0
  %v251 = vmax.f32 %v217, 0.0
  %v252 = vmax.f32 %v222, 0.0
  %v253 = vmax.f32 %v227, 0.0
  %v254 = vmax.f32 %v232, 0.0
  %v255 = vmax.f32 %v237, 0.0
  %v256 = vld [vmem:[%s2] sm:$0xff]
  %v257 = vld [vmem:[%s2 + $0x8] sm:$0xff]
  %v258 = vld [vmem:[%s2 + $0x10] sm:$0xff]
  %v259 = vld [vmem:[%s2 + $0x18] sm:$0xff]
  %v260 = vld [vmem:[%s2 + $0x20] sm:$0xff]
  %v261 = vld [vmem:[%s2 + $0x28] sm:$0xff]
  %v262 = vld [vmem:[%s2 + $0x30] sm:$0xff]
  %v263 = vld [vmem:[%s2 + $0x38] sm:$0xff]
  %v264 = vld [vmem:[%s2 + $0x40] sm:$0xff]
  %v265 = vld [vmem:[%s2 + $0x48] sm:$0xff]
  %v266 = vld [vmem:[%s2 + $0x50] sm:$0xff]
  %v267 = vld [vmem:[%s2 + $0x58] sm:$0xff]
  %v268 = vld [vmem:[%s2 + $0x60] sm:$0xff]
  %v269 = vld [vmem:[%s2 + $0x68] sm:$0xff]
  %v270 = vld [vmem:[%s2 + $0x70] sm:$0xff]
  %v271 = vld [vmem:[%s2 + $0x78] sm:$0xff]
  %v272 = vld [vmem:[%s4 + $0x1] sm:$0x1]
  %v273 = vlaneseq
  %v274 = vshrl.u32 %v273, 7
  %v275 = vsub.s32 0, %v274
  %v276 = vrot.slane %v272, %v275
  %277 = vmatprep.subr.mxu0 0.0
  %278 = vmatpush1.msra.mxu0 %v256
  %279 = vmatprep.subr.mxu0 0.0
  %280 = vmatpush1.msra.mxu0 %v257
  %281 = vmatprep.subr.mxu0 0.0
  %282 = vmatpush1.msra.mxu0 %v258
  %283 = vmatprep.subr.mxu0 0.0
  %284 = vmatpush1.msra.mxu0 %v259
  %285 = vmatprep.subr.mxu0 0.0
  %286 = vmatpush1.msra.mxu0 %v260
  %287 = vmatprep.subr.mxu0 0.0
  %288 = vmatpush1.msra.mxu0 %v261
  %289 = vmatprep.subr.mxu0 0.0
  %290 = vmatpush1.msra.mxu0 %v262
  %291 = vmatprep.subr.mxu0 0.0
  %292 = vmatpush1.msra.mxu0 %v263
  %293 = vmatprep.subr.mxu0 0.0
  %294 = vmatpush1.msra.mxu0 %v264
  %295 = vmatprep.subr.mxu0 0.0
  %296 = vmatpush1.msra.mxu0 %v265
  %297 = vmatprep.subr.mxu0 0.0
  %298 = vmatpush1.msra.mxu0 %v266
  %299 = vmatprep.subr.mxu0 0.0
  %300 = vmatpush1.msra.mxu0 %v267
  %301 = vmatprep.subr.mxu0 0.0
  %302 = vmatpush1.msra.mxu0 %v268
  %303 = vmatprep.subr.mxu0 0.0
  %304 = vmatpush1.msra.mxu0 %v269
  %305 = vmatprep.subr.mxu0 0.0
  %306 = vmatpush1.msra.mxu0 %v270
  %307 = vmatprep.subr.mxu0 0.0
  %308 = vmatpush1.msra.mxu0 %v271
  %309 = vmatprep.subr.mxu0 0.0
  %310 = vmatpush1.msra.mxu0 0.0
  %311 = vmatprep.subr.mxu0 0.0
  %312 = vmatpush1.msra.mxu0 0.0
  %313 = vmatprep.subr.mxu0 0.0
  %314 = vmatpush1.msra.mxu0 0.0
  %315 = vmatprep.subr.mxu0 0.0
  %316 = vmatpush1.msra.mxu0 0.0
  %317 = vmatprep.subr.mxu0 0.0
  %318 = vmatpush1.msra.mxu0 0.0
  %319 = vmatprep.subr.mxu0 0.0
  %320 = vmatpush1.msra.mxu0 0.0
  %321 = vmatprep.subr.mxu0 0.0
  %322 = vmatpush1.msra.mxu0 0.0
  %323 = vmatprep.subr.mxu0 0.0
  %324 = vmatpush1.msra.mxu0 0.0
  %325 = vmatprep.subr.mxu0 0.0
  %326 = vmatpush1.msra.mxu0 0.0
  %327 = vmatprep.subr.mxu0 0.0
  %328 = vmatpush1.msra.mxu0 0.0
  %329 = vmatprep.subr.mxu0 0.0
  %330 = vmatpush1.msra.mxu0 0.0
  %331 = vmatprep.subr.mxu0 0.0
  %332 = vmatpush1.msra.mxu0 0.0
  %333 = vmatprep.subr.mxu0 0.0
  %334 = vmatpush1.msra.mxu0 0.0
  %335 = vmatprep.subr.mxu0 0.0
  %336 = vmatpush1.msra.mxu0 0.0
  %337 = vmatprep.subr.mxu0 0.0
  %338 = vmatpush1.msra.mxu0 0.0
  %339 = vmatprep.subr.mxu0 0.0
  %340 = vmatpush1.msra.mxu0 0.0
  %341 = vmatprep.mubr.f32.mxu0 0.0
  %342 = vmatmul.mubr.f32.gmra.mrb[0].mxu0 %v240
  %v343 = vpop.f32.mrb[0].mxu0
  %v344 = vadd.f32 %v276, %v343
  %v345 = vpop.f32.mrb[0].mxu0
  %346 = vmatprep.mubr.f32.mxu0 0.0
  %347 = vmatmul.mubr.f32.gmra.mrb[0].mxu0 %v241
  %v348 = vpop.f32.mrb[0].mxu0
  %v349 = vadd.f32 %v276, %v348
  %v350 = vpop.f32.mrb[0].mxu0
  %351 = vmatprep.mubr.f32.mxu0 0.0
  %352 = vmatmul.mubr.f32.gmra.mrb[0].mxu0 %v242
  %v353 = vpop.f32.mrb[0].mxu0
  %v354 = vadd.f32 %v276, %v353
  %v355 = vpop.f32.mrb[0].mxu0
  %356 = vmatprep.mubr.f32.mxu0 0.0
  %357 = vmatmul.mubr.f32.gmra.mrb[0].mxu0 %v243
  %v358 = vpop.f32.mrb[0].mxu0
  %v359 = vadd.f32 %v276, %v358
  %v360 = vpop.f32.mrb[0].mxu0
  %361 = vmatprep.mubr.f32.mxu0 0.0
  %362 = vmatmul.mubr.f32.gmra.mrb[0].mxu0 %v244
  %v363 = vpop.f32.mrb[0].mxu0
  %v364 = vadd.f32 %v276, %v363
  %v365 = vpop.f32.mrb[0].mxu0
  %366 = vmatprep.mubr.f32.mxu0 0.0
  %367 = vmatmul.mubr.f32.gmra.mrb[0].mxu0 %v245
  %v368 = vpop.f32.mrb[0].mxu0
  %v369 = vadd.f32 %v276, %v368
  %v370 = vpop.f32.mrb[0].mxu0
  %371 = vmatprep.mubr.f32.mxu0 0.0
  %372 = vmatmul.mubr.f32.gmra.mrb[0].mxu0 %v246
  %v373 = vpop.f32.mrb[0].mxu0
  %v374 = vadd.f32 %v276, %v373
  %v375 = vpop.f32.mrb[0].mxu0
  %376 = vmatprep.mubr.f32.mxu0 0.0
  %377 = vmatmul.mubr.f32.gmra.mrb[0].mxu0 %v247
  %v378 = vpop.f32.mrb[0].mxu0
  %v379 = vadd.f32 %v276, %v378
  %v380 = vpop.f32.mrb[0].mxu0
  %381 = vmatprep.mubr.f32.mxu0 0.0
  %382 = vmatmul.mubr.f32.gmra.mrb[0].mxu0 %v248
  %v383 = vpop.f32.mrb[0].mxu0
  %v384 = vadd.f32 %v276, %v383
  %v385 = vpop.f32.mrb[0].mxu0
  %386 = vmatprep.mubr.f32.mxu0 0.0
  %387 = vmatmul.mubr.f32.gmra.mrb[0].mxu0 %v249
  %v388 = vpop.f32.mrb[0].mxu0
  %v389 = vadd.f32 %v276, %v388
  %v390 = vpop.f32.mrb[0].mxu0
  %391 = vmatprep.mubr.f32.mxu0 0.0
  %392 = vmatmul.mubr.f32.gmra.mrb[0].mxu0 %v250
  %v393 = vpop.f32.mrb[0].mxu0
  %v394 = vadd.f32 %v276, %v393
  %v395 = vpop.f32.mrb[0].mxu0
  %396 = vmatprep.mubr.f32.mxu0 0.0
  %397 = vmatmul.mubr.f32.gmra.mrb[0].mxu0 %v251
  %v398 = vpop.f32.mrb[0].mxu0
  %v399 = vadd.f32 %v276, %v398
  %v400 = vpop.f32.mrb[0].mxu0
  %401 = vmatprep.mubr.f32.mxu0 0.0
  %402 = vmatmul.mubr.f32.gmra.mrb[0].mxu0 %v252
  %v403 = vpop.f32.mrb[0].mxu0
  %v404 = vadd.f32 %v276, %v403
  %v405 = vpop.f32.mrb[0].mxu0
  %406 = vmatprep.mubr.f32.mxu0 0.0
  %407 = vmatmul.mubr.f32.gmra.mrb[0].mxu0 %v253
  %v408 = vpop.f32.mrb[0].mxu0
  %v409 = vadd.f32 %v276, %v408
  %v410 = vpop.f32.mrb[0].mxu0
  %411 = vmatprep.mubr.f32.mxu0 0.0
  %412 = vmatmul.mubr.f32.gmra.mrb[0].mxu0 %v254
  %v413 = vpop.f32.mrb[0].mxu0
  %v414 = vadd.f32 %v276, %v413
  %v415 = vpop.f32.mrb[0].mxu0
  %416 = vmatprep.mubr.f32.mxu0 0.0
  %417 = vmatmul.mubr.f32.gmra.mrb[0].mxu0 %v255
  %v418 = vpop.f32.mrb[0].mxu0
  %v419 = vadd.f32 %v276, %v418
  %v420 = vpop.f32.mrb[0].mxu0
  %421 = vdwg.mxu0
  %v422 = vmax.f32 %v344, 0.0
  %v423 = vmax.f32 %v349, 0.0
  %v424 = vmax.f32 %v354, 0.0
  %v425 = vmax.f32 %v359, 0.0
  %v426 = vmax.f32 %v364, 0.0
  %v427 = vmax.f32 %v369, 0.0
  %v428 = vmax.f32 %v374, 0.0
  %v429 = vmax.f32 %v379, 0.0
  %v430 = vmax.f32 %v384, 0.0
  %v431 = vmax.f32 %v389, 0.0
  %v432 = vmax.f32 %v394, 0.0
  %v433 = vmax.f32 %v399, 0.0
  %v434 = vmax.f32 %v404, 0.0
  %v435 = vmax.f32 %v409, 0.0
  %v436 = vmax.f32 %v414, 0.0
  %v437 = vmax.f32 %v419, 0.0
  %v438 = vld [vmem:[%s3] sm:$0xff]
  %v439 = vld [vmem:[%s5] sm:$0xff]
  %441 = vset.pattern.permute.xlu0 0
  %442 = vperm.xlu0 %441, %v439
  %v443 = vpop.permute.xlu0 %442
  %445 = vmatprep.subr.mxu0 0.0
  %446 = vmatpush1.xpose.msra.mxu0 %v422
  %447 = vmatprep.subr.mxu0 0.0
  %448 = vmatpush1.xpose.msra.mxu0 %v423
  %449 = vmatprep.subr.mxu0 0.0
  %450 = vmatpush1.xpose.msra.mxu0 %v424
  %451 = vmatprep.subr.mxu0 0.0
  %452 = vmatpush1.xpose.msra.mxu0 %v425
  %453 = vmatprep.subr.mxu0 0.0
  %454 = vmatpush1.xpose.msra.mxu0 %v426
  %455 = vmatprep.subr.mxu0 0.0
  %456 = vmatpush1.xpose.msra.mxu0 %v427
  %457 = vmatprep.subr.mxu0 0.0
  %458 = vmatpush1.xpose.msra.mxu0 %v428
  %459 = vmatprep.subr.mxu0 0.0
  %460 = vmatpush1.xpose.msra.mxu0 %v429
  %461 = vmatprep.subr.mxu0 0.0
  %462 = vmatpush1.xpose.msra.mxu0 %v430
  %463 = vmatprep.subr.mxu0 0.0
  %464 = vmatpush1.xpose.msra.mxu0 %v431
  %465 = vmatprep.subr.mxu0 0.0
  %466 = vmatpush1.xpose.msra.mxu0 %v432
  %467 = vmatprep.subr.mxu0 0.0
  %468 = vmatpush1.xpose.msra.mxu0 %v433
  %469 = vmatprep.subr.mxu0 0.0
  %470 = vmatpush1.xpose.msra.mxu0 %v434
  %471 = vmatprep.subr.mxu0 0.0
  %472 = vmatpush1.xpose.msra.mxu0 %v435
  %473 = vmatprep.subr.mxu0 0.0
  %474 = vmatpush1.xpose.msra.mxu0 %v436
  %475 = vmatprep.subr.mxu0 0.0
  %476 = vmatpush1.xpose.msra.mxu0 %v437
  %477 = vmatprep.subr.mxu0 0.0
  %478 = vmatpush1.xpose.msra.mxu0 0.0
  %479 = vmatprep.subr.mxu0 0.0
  %480 = vmatpush1.xpose.msra.mxu0 0.0
  %481 = vmatprep.subr.mxu0 0.0
  %482 = vmatpush1.xpose.msra.mxu0 0.0
  %483 = vmatprep.subr.mxu0 0.0
  %484 = vmatpush1.xpose.msra.mxu0 0.0
  %485 = vmatprep.subr.mxu0 0.0
  %486 = vmatpush1.xpose.msra.mxu0 0.0
  %487 = vmatprep.subr.mxu0 0.0
  %488 = vmatpush1.xpose.msra.mxu0 0.0
  %489 = vmatprep.subr.mxu0 0.0
  %490 = vmatpush1.xpose.msra.mxu0 0.0
  %491 = vmatprep.subr.mxu0 0.0
  %492 = vmatpush1.xpose.msra.mxu0 0.0
  %493 = vmatprep.subr.mxu0 0.0
  %494 = vmatpush1.xpose.msra.mxu0 0.0
  %495 = vmatprep.subr.mxu0 0.0
  %496 = vmatpush1.xpose.msra.mxu0 0.0
  %497 = vmatprep.subr.mxu0 0.0
  %498 = vmatpush1.xpose.msra.mxu0 0.0
  %499 = vmatprep.subr.mxu0 0.0
  %500 = vmatpush1.xpose.msra.mxu0 0.0
  %501 = vmatprep.subr.mxu0 0.0
  %502 = vmatpush1.xpose.msra.mxu0 0.0
  %503 = vmatprep.subr.mxu0 0.0
  %504 = vmatpush1.xpose.msra.mxu0 0.0
  %505 = vmatprep.subr.mxu0 0.0
  %506 = vmatpush1.xpose.msra.mxu0 0.0
  %507 = vmatprep.subr.mxu0 0.0
  %508 = vmatpush1.xpose.msra.mxu0 0.0
  %509 = vmatprep.mubr.f32.mxu0 0.0
  %510 = vmatmul.mubr.f32.gmra.mrb[0].mxu0 %v438
  %v511 = vpop.f32.mrb[0].mxu0
  %v512 = vadd.f32 %v443, %v511
  %v513 = vpop.f32.mrb[0].mxu0
  %514 = vdwg.mxu0
  %515 = vst [vmem:[%s6] sm:$0xff] %v512
  // Predicated region
  $region26: #{mlp_forward.1} parent=0 // pred_check
    _
  $region27: #{mlp_forward.1} parent=0 // pred_check_branch
    %517 = sbr.rel (0) target = $region29
  $region28: #{mlp_forward.1} parent=0 // pred_region
    _
  $region29: #{mlp_forward.1} parent=0 // pred_fallthru
    _
  // Predicated region
  $region30: #{mlp_forward.1} parent=0 // pred_check
    _
  $region31: #{mlp_forward.1} parent=0 // pred_check_branch
    %519 = sbr.rel (0) target = $region33
  $region32: #{mlp_forward.1} parent=0 // pred_region
    _
  $region33: #{mlp_forward.1} parent=0 // pred_fallthru
    _

</llo_original>
